<compile_context>
chip_gen: v7x
topology: tpu7x:2x2x1
jax: 0.10.0
libtpu: 0.0.40
codegen_flags: <defaults>
</compile_context>

<pallas_src>
import functools

import numpy as np
import jax
import jax.numpy as jnp
from jax import lax
from jax.experimental import pallas as pl
from jax.experimental.pallas import tpu as pltpu

KSIZE = 5
SIGMA = 1.5
PAD = KSIZE // 2  # 2


def _gaussian_1d():
    """1-D Gaussian taps whose outer product equals the PyTorch module's 5x5 kernel."""
    coords = np.arange(KSIZE, dtype=np.float64)
    mean = (KSIZE - 1) / 2.0
    g = np.exp(-((coords - mean) ** 2) / (2.0 * SIGMA ** 2))
    return g / g.sum()


def _gaussian_2d_f32():
    """Exact 2-D kernel the PyTorch module builds (for the reference check)."""
    g1 = _gaussian_1d()
    return np.outer(g1, g1).astype(np.float32)


def _blur_kernel(xp_ref, o_ref, *, hb, w, packed_w, taps):
    """Separable 5x5 Gaussian blur + clamp on a lane-packed slab.

    xp_ref: (1, H + 4, packed_w) row-padded, batch-lane-packed input. Its index_map is
            constant along the row-block grid axis, so it is DMA'd once per group and
            stays resident in VMEM.
    o_ref : (1, hb, packed_w) output row block (lane-dense store).
    """
    rb = pl.program_id(1)
    r0 = rb * hb
    if hb % 8 == 0:
        r0 = pl.multiple_of(r0, 8)

    # ---- vertical pass: 5 taps as ref loads at sublane offsets (no XLU work) ----
    v = taps[0] * xp_ref[0, pl.ds(r0, hb), :].astype(jnp.float32)
    for j in range(1, KSIZE):
        v = v + taps[j] * xp_ref[0, pl.ds(r0 + j, hb), :].astype(jnp.float32)

    # ---- horizontal pass: center tap + 4 masked lane rotations (XLU) ----
    # lane_x = column index within each packed image; the masks kill both the
    # image-to-image bleed and the slab-edge wrap-around of the rolls (== zero padding).
    lane_x = lax.broadcasted_iota(jnp.int32, (hb, packed_w), 1) % w
    acc = taps[PAD] * v
    for j in range(KSIZE):
        d = j - PAD
        if d == 0:
            continue
        rolled = pltpu.roll(v, shift=(-d) % packed_w, axis=1)
        mask = (lane_x < (w - d)) if d > 0 else (lane_x >= (-d))
        acc = acc + taps[j] * jnp.where(mask, rolled, 0.0)

    o_ref[0] = jnp.clip(acc, 0.0, 1.0).astype(o_ref.dtype)


def _vmem_budget_bytes():
    try:
        cap = int(pltpu.get_tpu_info().vmem_capacity_bytes)
    except Exception:
        cap = 64 << 20  # conservative (v7x-sized) fallback
    return int(cap * 0.8)


def _divisors_desc(n):
    return [d for d in range(n, 0, -1) if n % d == 0]


def gaussian_filter(img, a=1):
    """img: (N, 1, H, W) float32 -> (N, 1, H, W) float32, blurred and clamped to [0, 1]."""
    del a  # unused, mirrors the PyTorch forward signature
    n, c, h, w = img.shape
    assert c == 1, "Gaussian_filter is defined for single-channel input"
    dtype = img.dtype
    budget = _vmem_budget_bytes()

    # --- nb: images packed side-by-side along lanes (lane-dense when W < 128) ---
    nb = 1
    if w < 128:
        for cand in sorted(_divisors_desc(n)):  # ascending divisors of N
            nb = cand
            if cand * w >= 128:
                break
    # shrink nb if the resident padded slab (+ temporaries) would blow the VMEM budget
    while nb > 1 and 3 * (h + 2 * PAD) * (nb * w) * 4 > budget:
        nb = max(d for d in _divisors_desc(n) if d < nb)
    packed_w = nb * w
    g = n // nb

    # --- hb: output row-block height (multiple of 8 dividing H when possible) ---
    if h % 8 != 0:
        hb = h
    else:
        target = max(8, (1 << 21) // (packed_w * 4))  # ~2 MiB per slab-sized temp
        hb = 8
        for cand in range(8, h + 1, 8):
            if h % cand == 0 and cand <= target:
                hb = cand
        # prefer >=2 grid steps (v7x megacore / pipelining) when it costs nothing
        if g * (h // hb) == 1 and h % 16 == 0:
            hb = h // 2
    num_rb = h // hb

    # --- wrapper-side lane packing + 2-row halo (layout plumbing; fuses in XLA) ---
    x = img.reshape(g, nb, h, w).transpose(0, 2, 1, 3).reshape(g, h, packed_w)
    xp = jnp.pad(x, ((0, 0), (PAD, PAD), (0, 0)))

    taps = tuple(float(t) for t in _gaussian_1d())
    kernel = functools.partial(_blur_kernel, hb=hb, w=w, packed_w=packed_w, taps=taps)

    # VMEM footprint: resident input block (double-buffered across groups), output
    # blocks, and ~8 slab-sized elementwise/roll temporaries.
    need = ((2 if g > 1 else 1) * (h + 2 * PAD) * packed_w * 4
            + 2 * hb * packed_w * 4
            + 8 * hb * packed_w * 4
            + (1 << 20))
    cp_kwargs = dict(dimension_semantics=("parallel", "parallel"))
    if need > (12 << 20):
        cp_kwargs["vmem_limit_bytes"] = int(min(max(need + (8 << 20), 32 << 20), budget))

    out_packed = pl.pallas_call(
        kernel,
        out_shape=jax.ShapeDtypeStruct((g, h, packed_w), dtype),
        grid=(g, num_rb),
        in_specs=[pl.BlockSpec((1, h + 2 * PAD, packed_w), lambda gi, ri: (gi, 0, 0))],
        out_specs=pl.BlockSpec((1, hb, packed_w), lambda gi, ri: (gi, ri, 0)),
        compiler_params=pltpu.CompilerParams(**cp_kwargs),
    )(xp)

    # TODO(synk): if a single padded image ((H+4)*W*4 bytes) exceeds the VMEM budget
    # (very large images, especially on v7x's 64 MiB), switch the input to manual
    # row-halo DMA (memory_space=pl.ANY + pltpu.make_async_copy) instead of keeping the
    # whole padded slab resident.

    out = (out_packed.reshape(g, h, nb, w)
                     .transpose(0, 2, 1, 3)
                     .reshape(n, c, h, w))
    return out


def _reference(img):
    """Pure-JAX reference with the exact 2-D kernel the PyTorch module uses."""
    w2 = jnp.asarray(_gaussian_2d_f32()).reshape(1, 1, KSIZE, KSIZE)
    out = lax.conv_general_dilated(
        img, w2, window_strides=(1, 1), padding=((PAD, PAD), (PAD, PAD)),
        dimension_numbers=("NCHW", "OIHW", "NCHW"),
    )
    return jnp.clip(out, 0.0, 1.0)


if __name__ == "__main__":
    key = jax.random.PRNGKey(0)
    # Small shapes consistent with the module: batch=2, channels=1, spatial=16.
    img = jax.random.uniform(key, (2, 1, 16, 16), dtype=jnp.float32)

    out = gaussian_filter(img)
    out = jax.block_until_ready(out)

    ref = _reference(img)
    assert out.shape == (2, 1, 16, 16)
    assert jnp.allclose(out, ref, atol=1e-5), "mismatch vs reference conv"

    print("KERNEL_OK")
</pallas_src>

<mosaic_0001>
module attributes {stable_mosaic.version = 11 : i64} {
  func.func @_blur_kernel(%arg0: i32, %arg1: i32, %arg2: memref<1x20x32xf32, #tpu.memory_space<vmem>>, %arg3: memref<1x8x32xf32, #tpu.memory_space<vmem>>) attributes {dimension_semantics = [#tpu.dimension_semantics<parallel>, #tpu.dimension_semantics<parallel>], iteration_bounds = array<i64: 1, 2>, scalar_prefetch = 0 : i64, scratch_operands = 0 : i64, tpu.core_type = #tpu.core_type<tc>, window_params = [{transform_indices = @transform_0, window_bounds = array<i64: 1, 20, 32>}, {transform_indices = @transform_1, window_bounds = array<i64: 1, 8, 32>}]} {
    %c8_i32 = arith.constant 8 : i32
    %0 = arith.muli %arg1, %c8_i32 : i32
    %1 = tpu.assume_multiple %0, 8 : i32
    %c0 = arith.constant 0 : index
    %2 = arith.index_cast %1 : i32 to index
    %c0_0 = arith.constant 0 : index
    %3 = vector.load %arg2[%c0, %2, %c0_0] : memref<1x20x32xf32, #tpu.memory_space<vmem>>, vector<1x8x32xf32>
    %4 = vector.shape_cast %3 : vector<1x8x32xf32> to vector<8x32xf32>
    %cst = arith.constant 0.120078385 : f32
    %5 = vector.broadcast %cst : f32 to vector<8x32xf32>
    %6 = arith.mulf %5, %4 : vector<8x32xf32>
    %c1_i32 = arith.constant 1 : i32
    %7 = arith.addi %1, %c1_i32 : i32
    %c0_1 = arith.constant 0 : index
    %8 = arith.index_cast %7 : i32 to index
    %c0_2 = arith.constant 0 : index
    %9 = vector.load %arg2[%c0_1, %8, %c0_2] : memref<1x20x32xf32, #tpu.memory_space<vmem>>, vector<1x8x32xf32>
    %10 = vector.shape_cast %9 : vector<1x8x32xf32> to vector<8x32xf32>
    %cst_3 = arith.constant 0.233880758 : f32
    %11 = vector.broadcast %cst_3 : f32 to vector<8x32xf32>
    %12 = arith.mulf %11, %10 : vector<8x32xf32>
    %13 = arith.addf %6, %12 : vector<8x32xf32>
    %c2_i32 = arith.constant 2 : i32
    %14 = arith.addi %1, %c2_i32 : i32
    %c0_4 = arith.constant 0 : index
    %15 = arith.index_cast %14 : i32 to index
    %c0_5 = arith.constant 0 : index
    %16 = vector.load %arg2[%c0_4, %15, %c0_5] : memref<1x20x32xf32, #tpu.memory_space<vmem>>, vector<1x8x32xf32>
    %17 = vector.shape_cast %16 : vector<1x8x32xf32> to vector<8x32xf32>
    %cst_6 = arith.constant 0.292081714 : f32
    %18 = vector.broadcast %cst_6 : f32 to vector<8x32xf32>
    %19 = arith.mulf %18, %17 : vector<8x32xf32>
    %20 = arith.addf %13, %19 : vector<8x32xf32>
    %c3_i32 = arith.constant 3 : i32
    %21 = arith.addi %1, %c3_i32 : i32
    %c0_7 = arith.constant 0 : index
    %22 = arith.index_cast %21 : i32 to index
    %c0_8 = arith.constant 0 : index
    %23 = vector.load %arg2[%c0_7, %22, %c0_8] : memref<1x20x32xf32, #tpu.memory_space<vmem>>, vector<1x8x32xf32>
    %24 = vector.shape_cast %23 : vector<1x8x32xf32> to vector<8x32xf32>
    %cst_9 = arith.constant 0.233880758 : f32
    %25 = vector.broadcast %cst_9 : f32 to vector<8x32xf32>
    %26 = arith.mulf %25, %24 : vector<8x32xf32>
    %27 = arith.addf %20, %26 : vector<8x32xf32>
    %c4_i32 = arith.constant 4 : i32
    %28 = arith.addi %1, %c4_i32 : i32
    %c0_10 = arith.constant 0 : index
    %29 = arith.index_cast %28 : i32 to index
    %c0_11 = arith.constant 0 : index
    %30 = vector.load %arg2[%c0_10, %29, %c0_11] : memref<1x20x32xf32, #tpu.memory_space<vmem>>, vector<1x8x32xf32>
    %31 = vector.shape_cast %30 : vector<1x8x32xf32> to vector<8x32xf32>
    %cst_12 = arith.constant 0.120078385 : f32
    %32 = vector.broadcast %cst_12 : f32 to vector<8x32xf32>
    %33 = arith.mulf %32, %31 : vector<8x32xf32>
    %34 = arith.addf %27, %33 : vector<8x32xf32>
    %35 = tpu.iota {dimensions = array<i32: 1>} : vector<8x32xi32>
    %c16_i32 = arith.constant 16 : i32
    %c0_i32 = arith.constant 0 : i32
    %36 = arith.cmpi eq, %c16_i32, %c0_i32 : i32
    %c1_i32_13 = arith.constant 1 : i32
    %37 = arith.select %36, %c1_i32_13, %c16_i32 : i32
    %38 = vector.broadcast %37 : i32 to vector<8x32xi32>
    %39 = arith.remsi %35, %38 : vector<8x32xi32>
    %c0_i32_14 = arith.constant 0 : i32
    %40 = vector.broadcast %c0_i32_14 : i32 to vector<8x32xi32>
    %41 = arith.cmpi ne, %39, %40 : vector<8x32xi32>
    %c0_i32_15 = arith.constant 0 : i32
    %42 = vector.broadcast %c0_i32_15 : i32 to vector<8x32xi32>
    %43 = arith.cmpi slt, %39, %42 : vector<8x32xi32>
    %c0_i32_16 = arith.constant 0 : i32
    %44 = arith.cmpi slt, %37, %c0_i32_16 : i32
    %45 = vector.broadcast %44 : i1 to vector<8x32xi1>
    %46 = vector.broadcast %45 : vector<8x32xi1> to vector<8x32xi1>
    %47 = arith.xori %43, %46 : vector<8x32xi1>
    %48 = arith.andi %47, %41 : vector<8x32xi1>
    %49 = vector.broadcast %37 : i32 to vector<8x32xi32>
    %50 = arith.addi %39, %49 : vector<8x32xi32>
    %51 = arith.select %48, %50, %39 : vector<8x32xi1>, vector<8x32xi32>
    %cst_17 = arith.constant 0.292081714 : f32
    %52 = vector.broadcast %cst_17 : f32 to vector<8x32xf32>
    %53 = arith.mulf %52, %34 : vector<8x32xf32>
    %c2_i32_18 = arith.constant 2 : i32
    %54 = tpu.dynamic_rotate %34 by %c2_i32_18 dim 1 : vector<8x32xf32>, i32 -> vector<8x32xf32>
    %c2_i32_19 = arith.constant 2 : i32
    %55 = vector.broadcast %c2_i32_19 : i32 to vector<8x32xi32>
    %56 = arith.cmpi sge, %51, %55 : vector<8x32xi32>
    %cst_20 = arith.constant 0.000000e+00 : f32
    %57 = vector.broadcast %cst_20 : f32 to vector<8x32xf32>
    %58 = arith.select %56, %54, %57 : vector<8x32xi1>, vector<8x32xf32>
    %cst_21 = arith.constant 0.120078385 : f32
    %59 = vector.broadcast %cst_21 : f32 to vector<8x32xf32>
    %60 = arith.mulf %59, %58 : vector<8x32xf32>
    %61 = arith.addf %53, %60 : vector<8x32xf32>
    %c1_i32_22 = arith.constant 1 : i32
    %62 = tpu.dynamic_rotate %34 by %c1_i32_22 dim 1 : vector<8x32xf32>, i32 -> vector<8x32xf32>
    %c1_i32_23 = arith.constant 1 : i32
    %63 = vector.broadcast %c1_i32_23 : i32 to vector<8x32xi32>
    %64 = arith.cmpi sge, %51, %63 : vector<8x32xi32>
    %cst_24 = arith.constant 0.000000e+00 : f32
    %65 = vector.broadcast %cst_24 : f32 to vector<8x32xf32>
    %66 = arith.select %64, %62, %65 : vector<8x32xi1>, vector<8x32xf32>
    %cst_25 = arith.constant 0.233880758 : f32
    %67 = vector.broadcast %cst_25 : f32 to vector<8x32xf32>
    %68 = arith.mulf %67, %66 : vector<8x32xf32>
    %69 = arith.addf %61, %68 : vector<8x32xf32>
    %c31_i32 = arith.constant 31 : i32
    %70 = tpu.dynamic_rotate %34 by %c31_i32 dim 1 : vector<8x32xf32>, i32 -> vector<8x32xf32>
    %c15_i32 = arith.constant 15 : i32
    %71 = vector.broadcast %c15_i32 : i32 to vector<8x32xi32>
    %72 = arith.cmpi slt, %51, %71 : vector<8x32xi32>
    %cst_26 = arith.constant 0.000000e+00 : f32
    %73 = vector.broadcast %cst_26 : f32 to vector<8x32xf32>
    %74 = arith.select %72, %70, %73 : vector<8x32xi1>, vector<8x32xf32>
    %cst_27 = arith.constant 0.233880758 : f32
    %75 = vector.broadcast %cst_27 : f32 to vector<8x32xf32>
    %76 = arith.mulf %75, %74 : vector<8x32xf32>
    %77 = arith.addf %69, %76 : vector<8x32xf32>
    %c30_i32 = arith.constant 30 : i32
    %78 = tpu.dynamic_rotate %34 by %c30_i32 dim 1 : vector<8x32xf32>, i32 -> vector<8x32xf32>
    %c14_i32 = arith.constant 14 : i32
    %79 = vector.broadcast %c14_i32 : i32 to vector<8x32xi32>
    %80 = arith.cmpi slt, %51, %79 : vector<8x32xi32>
    %cst_28 = arith.constant 0.000000e+00 : f32
    %81 = vector.broadcast %cst_28 : f32 to vector<8x32xf32>
    %82 = arith.select %80, %78, %81 : vector<8x32xi1>, vector<8x32xf32>
    %cst_29 = arith.constant 0.120078385 : f32
    %83 = vector.broadcast %cst_29 : f32 to vector<8x32xf32>
    %84 = arith.mulf %83, %82 : vector<8x32xf32>
    %85 = arith.addf %77, %84 : vector<8x32xf32>
    %cst_30 = arith.constant 0.000000e+00 : f32
    %cst_31 = arith.constant 1.000000e+00 : f32
    %86 = vector.broadcast %cst_30 : f32 to vector<8x32xf32>
    %87 = arith.maximumf %86, %85 : vector<8x32xf32>
    %88 = vector.broadcast %cst_31 : f32 to vector<8x32xf32>
    %89 = arith.minimumf %88, %87 : vector<8x32xf32>
    %c0_32 = arith.constant 0 : index
    %c0_33 = arith.constant 0 : index
    %c0_34 = arith.constant 0 : index
    %90 = vector.load %arg3[%c0_32, %c0_33, %c0_34] : memref<1x8x32xf32, #tpu.memory_space<vmem>>, vector<1x8x32xf32>
    %91 = vector.shape_cast %90 : vector<1x8x32xf32> to vector<8x32xf32>
    %92 = vector.shape_cast %89 : vector<8x32xf32> to vector<1x8x32xf32>
    tpu.vector_store %arg3[%c0_32, %c0_33, %c0_34], %92 {strides = array<i32>} : memref<1x8x32xf32, #tpu.memory_space<vmem>>, vector<1x8x32xf32>,
    return
  }
  func.func @transform_0(%arg0: i32, %arg1: i32) -> (i32, i32, i32) {
    %c0_i32 = arith.constant 0 : i32
    %c0_i32_0 = arith.constant 0 : i32
    %c0_i32_1 = arith.constant 0 : i32
    return %arg0, %c0_i32, %c0_i32_0 : i32, i32, i32
  }
  func.func @transform_1(%arg0: i32, %arg1: i32) -> (i32, i32, i32) {
    %c0_i32 = arith.constant 0 : i32
    %c0_i32_0 = arith.constant 0 : i32
    return %arg0, %arg1, %c0_i32 : i32, i32, i32
  }
}

</mosaic_0001>

<llo_original>
// kernel: tpu_custom_call.1
$region0: #{tpu_custom_call.1}
  #allocation0 [shape = 'u32[]', space=smem, size = 0x4, offset = 0x4, fixed_abs, tag = 'smem constant byte address 0x4 - core index']
  #allocation1 [shape = 'u32[144,128]{1,0:T(1,128)}', space=vmem, size = 0x12000, scoped, tag = 'internal scratch']
  %s0 = inlined_call_operand.vmem [shape: f32[1,20,32], index: 0, kind: input, shape index: {}]
  %s1 = inlined_call_operand.hbm [shape: f32[1,16,32], index: 1, kind: output, shape index: {}]
  %s2 = sld [smem:[#allocation0]]
  $region37: #{tpu_custom_call.1} parent=0
    _
  %s4 = ssub.s32 1, %s2
  %s5 = scalar_select 0, %s4, %s2
  $region1: #{tpu_custom_call.1} parent=0
    #allocation2 [shape = 'u8[8192]{0}', space=vmem, size = 0x2000, scoped, tag = 'output window, operand 0']
    #allocation3 [shape = 's32[2]{0}', space=sflag, size = 0x8, scoped, tag = 'scoped memory for tpu_custom_call.1']
    %6 = vsyncpa [#allocation3], 0
    %s7 = scalar_lea.sflag [#allocation3], 1
    %8 = vsyncpa %s7, 0
    loop: start=0, step=1, limit=4
    $region2: #{tpu_custom_call.1} parent=1 // loop_pre_header
      _
    $region3: #{tpu_custom_call.1} parent=1 // loop_header
      %s10 = sphi 0, %s14
      %p11 = scmp.ge.s32.totalorder %s10, 4
      %s17 = sphi 0, %s29
      %s18 = sphi 0, %s25
      %s19 = sphi 0, %s17
      %s20 = sphi 0, %s18
      %s21 = sphi 0, %s19
      %s22 = sphi 0, %s20
      %s32 = sphi 0, %s34
      %s35 = sphi 0, %s32
      %s36 = sphi 0, %s35
      %s52 = sphi 0, %s36
      %s60 = sphi 0, %s62
      %s63 = sphi 0, %s60
      %s64 = sphi 0, %s63
      %s80 = sphi 0, %s64
    $region4: #{tpu_custom_call.1} parent=1 // loop_header_branch
      %13 = sbr.rel (%p11) target = $region8
    $region5: #{tpu_custom_call.1} parent=1 // loop_body
      %s15 = ssub.s32 %s10, 1
      %s16 = ssub.s32 %s10, 2
      %s23 = sadd.s32 1, %s18
      %p24 = scmp.ge.s32.totalorder %s23, 2
      %s25 = scalar_select %p24, 0, %s23
      %s26 = sadd.s32 1, %s17
      %s27 = scalar_select %p24, %s26, %s17
      %p28 = scmp.ge.s32.totalorder %s27, 1
      %s29 = scalar_select %p28, 0, %s27
      %s30 = ssub.s32 %s17, %s29
      %p31 = scmp.eq.s32.totalorder %s30, 0
      %s33 = sadd.s32 %s32, 1
      %s34 = scalar_select %p31, %s32, %s33
      %p37 = pneg %p31
      %p38 = scmp.eq.s32.totalorder %s10, 1
      %p39 = por %p37, %p38
      %p40 = scmp.ne.s32.totalorder %s32, %s35
      %p41 = scmp.eq.s32.totalorder %s10, 0
      %p42 = por %p40, %p41
      %p43 = scmp.ne.s32.totalorder %s32, %s35
      %p44 = scmp.eq.s32.totalorder %s15, 1
      %p45 = por %p43, %p44
      %p46 = scmp.ne.s32.totalorder %s35, %s36
      %p47 = scmp.eq.s32.totalorder %s15, 0
      %p48 = por %p46, %p47
      %p49 = scmp.ne.s32.totalorder %s35, %s36
      %p50 = scmp.eq.s32.totalorder %s16, 1
      %p51 = por %p49, %p50
      %p53 = scmp.ne.s32.totalorder %s36, %s52
      %p54 = scmp.eq.s32.totalorder %s16, 0
      %p55 = por %p53, %p54
      %s56 = ssub.s32 %s17, %s29
      %s57 = ssub.s32 %s18, %s25
      %s58 = sor.u32 %s56, %s57
      %p59 = scmp.eq.s32.totalorder %s58, 0
      %s61 = sadd.s32 %s60, 1
      %s62 = scalar_select %p59, %s60, %s61
      %p65 = pneg %p59
      %p66 = scmp.eq.s32.totalorder %s10, 1
      %p67 = por %p65, %p66
      %p68 = scmp.ne.s32.totalorder %s60, %s63
      %p69 = scmp.eq.s32.totalorder %s10, 0
      %p70 = por %p68, %p69
      %p71 = scmp.ne.s32.totalorder %s60, %s63
      %p72 = scmp.eq.s32.totalorder %s15, 1
      %p73 = por %p71, %p72
      %p74 = scmp.ne.s32.totalorder %s63, %s64
      %p75 = scmp.eq.s32.totalorder %s15, 0
      %p76 = por %p74, %p75
      %p77 = scmp.ne.s32.totalorder %s63, %s64
      %p78 = scmp.eq.s32.totalorder %s16, 1
      %p79 = por %p77, %p78
      %p81 = scmp.ne.s32.totalorder %s64, %s80
      %p82 = scmp.eq.s32.totalorder %s16, 0
      %p83 = por %p81, %p82
      %p84 = scmp.le.s32.totalorder 1, %s10
      %p85 = scmp.lt.s32.totalorder %s10, 3
      %p86 = pnand %p84, %p85
      %p87 = pneg %p86
      // Predicated region
      $region9: #{tpu_custom_call.1} parent=5 // pred_check
        _
      $region10: #{tpu_custom_call.1} parent=5 // pred_check_branch
        %89 = sbr.rel (%p86) target = $region12
      $region11: #{tpu_custom_call.1} parent=5 // pred_region
        %s90 = ssub.s32 %s10, 1
        // Predicated region
        $region13: #{tpu_custom_call.1} parent=11 // pred_check
          %p91 = pneg %p48
        $region14: #{tpu_custom_call.1} parent=11 // pred_check_branch
          %93 = sbr.rel (%p91) target = $region16
        $region15: #{tpu_custom_call.1} parent=11 // pred_region
          %p94 = scmp.lt.s32.totalorder %s19, 0
          %s95 = scalar_select %p94, %s19, 0
          %s96 = smul.addr %s95, 3
          %s97 = smul.addr %s96, 8
          %s98 = scalar_lea.vmem %s0, %s97
        $region16: #{tpu_custom_call.1} parent=11 // pred_fallthru
          _
      $region12: #{tpu_custom_call.1} parent=5 // pred_fallthru
        _
      %p99 = scmp.lt.s32.totalorder %s10, 2
      // Predicated region
      $region17: #{tpu_custom_call.1} parent=5 // pred_check
        %p100 = pneg %p99
      $region18: #{tpu_custom_call.1} parent=5 // pred_check_branch
        %102 = sbr.rel (%p100) target = $region20
      $region19: #{tpu_custom_call.1} parent=5 // pred_region
        _
      $region20: #{tpu_custom_call.1} parent=5 // pred_fallthru
        _
      %p103 = scmp.le.s32.totalorder 1, %s10
      %p104 = scmp.lt.s32.totalorder %s10, 3
      %p105 = pnand %p103, %p104
      %p106 = pneg %p105
      // Predicated region
      $region21: #{tpu_custom_call.1} parent=5 // pred_check
        _
      $region22: #{tpu_custom_call.1} parent=5 // pred_check_branch
        %108 = sbr.rel (%p105) target = $region24
      $region23: #{tpu_custom_call.1} parent=5 // pred_region
        %s109 = ssub.s32 %s10, 1
        %p110 = scmp.lt.s32.totalorder %s19, 0
        %s111 = scalar_select %p110, %s19, 0
        %s112 = smul.addr %s111, 3
        %s113 = smul.addr %s112, 8
        %s114 = scalar_lea.vmem %s0, %s113
        %p115 = pneg %p48
        %p116 = pneg %p45
        %p117 = pneg %p76
        %p118 = pneg %p73
        %s119 = sand.u32 %s63, 1
        %s120 = scalar_lea.sflag [#allocation3], %s119
        %s121 = sand.u32 %s63, 1
        %s122 = smul.addr %s121, 8
        %s123 = scalar_lea.vmem [#allocation2], %s122
        %p124 = scmp.lt.s32.totalorder %s19, 0
        %s125 = scalar_select %p124, %s19, 0
        %s126 = smul.addr %s125, 3
        %s127 = smul.addr %s126, 8
        %s128 = scalar_lea.vmem %s0, %s127
        %s129 = smul.u32 %s20, 8
        %s130 = scalar_lea.vmem %s128, %s129
        %v131 = vld [vmem:[%s130] sm:$0xff]
        %v132 = vmul.f32 %v131, 0.120078385
        %s133 = sadd.s32 %s129, 1
        %s134 = scalar_lea.vmem %s128, %s133
        %v135 = vld [vmem:[%s134] sm:$0xff]
        %v136 = vmul.f32 %v135, 0.23388076
        %v137 = vadd.f32 %v132, %v136
        %s138 = sadd.s32 %s129, 2
        %s139 = scalar_lea.vmem %s128, %s138
        %v140 = vld [vmem:[%s139] sm:$0xff]
        %v141 = vmul.f32 %v140, 0.2920817
        %v142 = vadd.f32 %v137, %v141
        %s143 = sadd.s32 %s129, 3
        %s144 = scalar_lea.vmem %s128, %s143
        %v145 = vld [vmem:[%s144] sm:$0xff]
        %v146 = vmul.f32 %v145, 0.23388076
        %v147 = vadd.f32 %v142, %v146
        %s148 = sadd.s32 %s129, 4
        %s149 = scalar_lea.vmem %s128, %s148
        %v150 = vld [vmem:[%s149] sm:$0xff]
        %v151 = vmul.f32 %v150, 0.120078385
        %v152 = vadd.f32 %v147, %v151
        %v153 = vlaneseq
        %v154 = vand.u32 %v153, 127
        %vm155 = vcmp.lt.s32.totalorder %v154, 0
        %v156 = vsub.s32 0, %v154
        %v157 = vsel %vm155, %v156, %v154
        %v158 = vshrl.u32 %v157, 4
        %v159 = vand.u32 %v157, 15
        %v160 = vsub.s32 0, %v159
        %v161 = vsel %vm155, %v160, %v159
        %vm162 = vcmp.ne.s32.totalorder %v161, 0
        %vm163 = vcmp.lt.s32.totalorder %v161, 0
        %vm164 = vmand %vm163, %vm162
        %v165 = vadd.s32 %v161, 16
        %v166 = vsel %vm164, %v165, %v161
        %v167 = vmul.f32 %v152, 0.2920817
        %vm168 = vcmask 1047808
        %169 = vrot.lane.b32.xlu0 %v152, 32
        %v170 = vpop.permute.xlu0 %169
        %v171 = vsel %vm168, %v170, %v152
        %172 = vrot.lane.b32.xlu0 %v171, 32
        %v173 = vpop.permute.xlu0 %172
        %v174 = vsel %vm168, %v173, %v152
        %vm175 = vcmp.ge.s32.totalorder %v166, 2
        %177 = vrot.lane.b32.xlu0 %v174, 98
        %v178 = vpop.permute.xlu0 %177
        %v180 = vsel %vm175, %v178, 0.0
        %v181 = vmul.f32 %v180, 0.120078385
        %v182 = vadd.f32 %v167, %v181
        %vm183 = vcmp.ge.s32.totalorder %v166, 1
        %184 = vrot.lane.b32.xlu0 %v174, 97
        %v185 = vpop.permute.xlu0 %184
        %v187 = vsel %vm183, %v185, 0.0
        %v188 = vmul.f32 %v187, 0.23388076
        %v189 = vadd.f32 %v182, %v188
        %vm190 = vcmp.lt.s32.totalorder %v166, 15
        %191 = vrot.lane.b32.xlu0 %v174, 127
        %v192 = vpop.permute.xlu0 %191
        %v194 = vsel %vm190, %v192, 0.0
        %v195 = vmul.f32 %v194, 0.23388076
        %v196 = vadd.f32 %v189, %v195
        %vm197 = vcmp.lt.s32.totalorder %v166, 14
        %198 = vrot.lane.b32.xlu0 %v174, 126
        %v199 = vpop.permute.xlu0 %198
        %v201 = vsel %vm197, %v199, 0.0
        %v202 = vmul.f32 %v201, 0.120078385
        %v203 = vadd.f32 %v196, %v202
        %v204 = vmax.f32 %v203, 0.0
        %v205 = vmin.f32 %v204, 1.0
        %vm206 = vcmask 261120
        %207 = vst.msk [vmem:[%s123] sm:$0xff] %vm206, %v205
        %s208 = sand.u32 %s63, 1
        %s209 = scalar_lea.sflag [#allocation3], %s208
        %s210 = sand.u32 %s63, 1
        %s211 = smul.addr %s210, 8
        %s212 = scalar_lea.vmem [#allocation2], %s211
        // Predicated region
        $region25: #{tpu_custom_call.1} parent=23 // pred_check
          %p213 = pneg %p73
        $region26: #{tpu_custom_call.1} parent=23 // pred_check_branch
          %215 = sbr.rel (%p213) target = $region28
        $region27: #{tpu_custom_call.1} parent=23 // pred_region
          %s217 = ssub.s32 128, 128
          %218 = vsyncadd %s209, %s217
          %s219 = smul.addr %s19, 2
          %s220 = sadd.s32 %s20, %s219
          %s221 = smul.addr %s220, 128
          %s222 = scalar_lea.hbm %s1, %s221
          %s224 = sshll.u32 %s212, 4
          %s225 = int_to_ptr.vmem [resolvable:$true] %s224
          %227 = dma.vmem_to_hbm [thread:$0]  %s225, 128, %s222, %s209
        $region28: #{tpu_custom_call.1} parent=23 // pred_fallthru
          _
      $region24: #{tpu_custom_call.1} parent=5 // pred_fallthru
        _
      %p228 = scmp.le.s32.totalorder 2, %s10
      // Predicated region
      $region29: #{tpu_custom_call.1} parent=5 // pred_check
        %p229 = pneg %p228
      $region30: #{tpu_custom_call.1} parent=5 // pred_check_branch
        %231 = sbr.rel (%p229) target = $region32
      $region31: #{tpu_custom_call.1} parent=5 // pred_region
        %s232 = ssub.s32 %s10, 2
        // Predicated region
        $region33: #{tpu_custom_call.1} parent=31 // pred_check
          %p233 = pneg %p79
        $region34: #{tpu_custom_call.1} parent=31 // pred_check_branch
          %235 = sbr.rel (%p233) target = $region36
        $region35: #{tpu_custom_call.1} parent=31 // pred_region
          %s236 = sand.u32 %s64, 1
          %s237 = scalar_lea.sflag [#allocation3], %s236
          %s238 = sand.u32 %s64, 1
          %s239 = smul.addr %s238, 8
          %s240 = scalar_lea.vmem [#allocation2], %s239
          %241 = dma.done %s237, 128
        $region36: #{tpu_custom_call.1} parent=31 // pred_fallthru
          _
      $region32: #{tpu_custom_call.1} parent=5 // pred_fallthru
        _
    $region6: #{tpu_custom_call.1} parent=1 // loop_footer
      %s14 = sadd.s32 1, %s10
    $region7: #{tpu_custom_call.1} parent=1 // loop_footer_branch
      %9 = sbr.rel target = $region3
    $region8: #{tpu_custom_call.1} parent=1 // loop_exit
      _
    %242 = vsyncpa [#allocation3], 1
    %s243 = scalar_lea.sflag [#allocation3], 1
    %244 = vsyncpa %s243, 1

</llo_original>
